<compile_context>
chip_gen: v7x
topology: tpu7x:2x2x1
jax: 0.10.0
libtpu: 0.0.40
codegen_flags: <defaults>
</compile_context>

<pallas_src>
import jax
import jax.numpy as jnp
from jax import lax
from jax.experimental import pallas as pl
from jax.experimental.pallas import tpu as pltpu

N_FEATURES = 8                      # Titanic engineered-feature count
HIDDEN = (128, 64, 32, 16)
BN_EPS = 1e-5

# Static offsets into the packed per-feature vector: [shifts(240) | w5(16) | b5(1) | pad].
_SH_OFF = (0, 128, 192, 224)                      # shift block offsets per layer
_W5_OFF = sum(HIDDEN)                             # 240
_B5_OFF = _W5_OFF + HIDDEN[-1]                    # 256
_VEC_LEN = ((_B5_OFF + 1 + 7) // 8) * 8           # 264 (sublane-aligned)


# ---------------------------------------------------------------------------
# Kernel
# ---------------------------------------------------------------------------
def _mlp_kernel(x_ref, w1_ref, w2_ref, w3_ref, w4_ref, vec_ref, o_ref):
    """Forward pass for one batch tile; batch ends up on the lane axis.

    x_ref  : (BT, F)   f32   batch tile (sublanes), features (lanes)
    wN_ref : (out, in) f32   eval-mode BN scale pre-folded into each output row
    vec_ref: (264, 1)  f32   [shift1..4 (240) | w5 (16) | b5 (1) | pad]
    o_ref  : (1, BT)   f32   sigmoid probabilities, lane-dense
    """

    def shift_relu(z, layer):
        # z: (H, BT) f32; BN scale already folded into W, only the shift remains.
        lo = _SH_OFF[layer]
        sh = vec_ref[lo:lo + HIDDEN[layer], :]        # (H, 1) static slice
        return jnp.maximum(z + sh, 0.0)

    # Layer 1: contract over F without a materialized transpose of x (A @ B^T).
    h = lax.dot_general(
        w1_ref[...], x_ref[...],
        dimension_numbers=(((1,), (1,)), ((), ())),
        preferred_element_type=jnp.float32)           # (128, BT)
    h = shift_relu(h, 0)
    h = jnp.dot(w2_ref[...], h, preferred_element_type=jnp.float32)   # (64, BT)
    h = shift_relu(h, 1)
    h = jnp.dot(w3_ref[...], h, preferred_element_type=jnp.float32)   # (32, BT)
    h = shift_relu(h, 2)
    h = jnp.dot(w4_ref[...], h, preferred_element_type=jnp.float32)   # (16, BT)
    h = shift_relu(h, 3)

    # Final 16 -> 1 layer on the VPU/XLU: no MXU pass for a 1-row result.
    w5 = vec_ref[_W5_OFF:_W5_OFF + HIDDEN[-1], :]     # (16, 1)
    b5 = vec_ref[_B5_OFF:_B5_OFF + 1, :]              # (1, 1)
    z = jnp.sum(h * w5, axis=0, keepdims=True) + b5   # (1, BT), lane-dense

    # sigmoid(z) == 0.5 * (1 + tanh(z/2)); tanh runs on the EUP and is robust.
    o_ref[...] = 0.5 * (1.0 + jnp.tanh(0.5 * z))


# ---------------------------------------------------------------------------
# Parameters
# ---------------------------------------------------------------------------
def init_params(key, n_features=N_FEATURES):
    """PyTorch-style Linear init + non-trivial eval-mode BN running stats."""
    dims = (n_features,) + HIDDEN + (1,)
    params = {}
    keys = iter(jax.random.split(key, 6 * (len(dims) - 1)))
    for li in range(len(dims) - 1):
        fan_in, fan_out = dims[li], dims[li + 1]
        bound = 1.0 / float(fan_in) ** 0.5
        params[f"w{li + 1}"] = jax.random.uniform(
            next(keys), (fan_in, fan_out), jnp.float32, -bound, bound)
        params[f"b{li + 1}"] = jax.random.uniform(
            next(keys), (fan_out,), jnp.float32, -bound, bound)
        if li < len(dims) - 2:                        # BN only on hidden layers
            params[f"gamma{li + 1}"] = jax.random.uniform(
                next(keys), (fan_out,), jnp.float32, 0.8, 1.2)
            params[f"beta{li + 1}"] = 0.1 * jax.random.normal(
                next(keys), (fan_out,), jnp.float32)
            params[f"mean{li + 1}"] = 0.1 * jax.random.normal(
                next(keys), (fan_out,), jnp.float32)
            params[f"var{li + 1}"] = jax.random.uniform(
                next(keys), (fan_out,), jnp.float32, 0.5, 1.5)
    return params


def prepare_params(params):
    """One-time fold/pack of the module params into kernel operands.

    Called once (outside the hot path):
      * W_l' = scale_l[:, None] * W_l^T   (BN scale folded into weights, (out, in))
      * shift_l = (b_l - mean_l) * scale_l + beta_l  (only per-feature add remains)
      * shifts | w5 | b5 packed into one (264, 1) f32 side vector.
    """
    prepped = {}
    shifts = []
    for li in range(1, 5):
        scale = params[f"gamma{li}"] / jnp.sqrt(params[f"var{li}"] + BN_EPS)
        shift = (params[f"b{li}"] - params[f"mean{li}"]) * scale + params[f"beta{li}"]
        prepped[f"w{li}"] = (params[f"w{li}"].T * scale[:, None]).astype(jnp.float32)
        shifts.append(shift)
    vec = jnp.concatenate(
        shifts + [params["w5"].reshape(-1), params["b5"].reshape(-1)]
    ).astype(jnp.float32)
    vec = jnp.pad(vec, (0, _VEC_LEN - vec.shape[0]))
    prepped["vec"] = vec.reshape(_VEC_LEN, 1)
    return prepped


# ---------------------------------------------------------------------------
# Tiling & wrapper
# ---------------------------------------------------------------------------
def _choose_tiling(batch, max_tile=2048):
    """Minimal-padding, lane-aligned batch tiling.

    - batch padded to a multiple of 128 (lane width),
    - >= 2 tiles once the padded batch reaches 256 so both v7x TensorCores get
      work (an extra ~0.35us grid step is noise on 1-TC v5e/v6e),
    - tiles capped at `max_tile` rows to amortize per-step pipeline overhead
      while keeping VMEM usage at a few MiB.
    """
    padded = ((batch + 127) // 128) * 128
    num_tiles = pl.cdiv(padded, max_tile)
    if num_tiles == 1 and padded >= 256:
        num_tiles = 2
    tile = ((pl.cdiv(padded, num_tiles) + 127) // 128) * 128
    return tile * num_tiles, tile, num_tiles


@jax.jit
def titanic_nn_forward(x, prepped):
    """x: (B, N_FEATURES) f32 standardized features -> (B, 1) probabilities."""
    B, F = x.shape
    padded_B, batch_tile, num_tiles = _choose_tiling(B)

    # Only a cheap row-pad on the hot path; no transpose, no re-cast of params.
    x_p = jnp.pad(x.astype(jnp.float32), ((0, padded_B - B), (0, 0)))

    w1, w2, w3, w4, vec = (prepped["w1"], prepped["w2"], prepped["w3"],
                           prepped["w4"], prepped["vec"])

    full = lambda a: pl.BlockSpec(a.shape, lambda i: (0, 0))

    grid_spec = pltpu.PrefetchScalarGridSpec(
        num_scalar_prefetch=0,
        grid=(num_tiles,),
        in_specs=[
            pl.BlockSpec((batch_tile, F), lambda i: (i, 0)),   # x tile
            full(w1), full(w2), full(w3), full(w4), full(vec),
        ],
        out_specs=pl.BlockSpec((1, batch_tile), lambda i: (0, i)),
    )

    out = pl.pallas_call(
        _mlp_kernel,
        out_shape=jax.ShapeDtypeStruct((1, padded_B), jnp.float32),
        grid_spec=grid_spec,
        compiler_params=pltpu.CompilerParams(
            dimension_semantics=("parallel",)),
    )(x_p, w1, w2, w3, w4, vec)

    return out.reshape(padded_B, 1)[:B]


# ---------------------------------------------------------------------------
# Pure-JAX reference (eval-mode BN, dropout identity)
# ---------------------------------------------------------------------------
def _reference_forward(x, params):
    h = x
    for li in range(1, 5):
        h = jnp.dot(h, params[f"w{li}"], precision="highest") + params[f"b{li}"]
        h = (h - params[f"mean{li}"]) / jnp.sqrt(params[f"var{li}"] + BN_EPS)
        h = h * params[f"gamma{li}"] + params[f"beta{li}"]
        h = jnp.maximum(h, 0.0)
    z = jnp.dot(h, params["w5"], precision="highest") + params["b5"]
    return jax.nn.sigmoid(z)


if __name__ == "__main__":
    key = jax.random.PRNGKey(0)
    k_param, k_x1, k_x2 = jax.random.split(key, 3)

    params = init_params(k_param)
    prepped = prepare_params(params)          # one-time parameter prep

    # Small batch: single 128-row tile, grid = (1,).
    x_small = jax.random.normal(k_x1, (32, N_FEATURES), jnp.float32)
    out_small = jax.block_until_ready(titanic_nn_forward(x_small, prepped))
    ref_small = _reference_forward(x_small, params)
    assert out_small.shape == (32, 1)
    assert jnp.allclose(out_small, ref_small, atol=1e-2, rtol=1e-2), "small-batch mismatch"

    # Awkward batch: exercises row padding and the 2-tile "parallel" grid path.
    x_big = jax.random.normal(k_x2, (300, N_FEATURES), jnp.float32)
    out_big = jax.block_until_ready(titanic_nn_forward(x_big, prepped))
    ref_big = _reference_forward(x_big, params)
    assert out_big.shape == (300, 1)
    assert jnp.allclose(out_big, ref_big, atol=1e-2, rtol=1e-2), "large-batch mismatch"

    print("KERNEL_OK")
</pallas_src>

<mosaic_0001>
module attributes {stable_mosaic.version = 11 : i64} {
  func.func @_mlp_kernel(%arg0: i32, %arg1: memref<128x8xf32, #tpu.memory_space<vmem>>, %arg2: memref<128x8xf32, #tpu.memory_space<vmem>>, %arg3: memref<64x128xf32, #tpu.memory_space<vmem>>, %arg4: memref<32x64xf32, #tpu.memory_space<vmem>>, %arg5: memref<16x32xf32, #tpu.memory_space<vmem>>, %arg6: memref<264x1xf32, #tpu.memory_space<vmem>>, %arg7: memref<1x128xf32, #tpu.memory_space<vmem>>) attributes {dimension_semantics = [#tpu.dimension_semantics<parallel>], iteration_bounds = array<i64: 1>, scalar_prefetch = 0 : i64, scratch_operands = 0 : i64, tpu.core_type = #tpu.core_type<tc>, window_params = [{transform_indices = @transform_0, window_bounds = array<i64: 128, 8>}, {pipeline_mode = #tpu.pipeline_mode<synchronous>, transform_indices = @transform_1, window_bounds = array<i64: 128, 8>}, {pipeline_mode = #tpu.pipeline_mode<synchronous>, transform_indices = @transform_2, window_bounds = array<i64: 64, 128>}, {pipeline_mode = #tpu.pipeline_mode<synchronous>, transform_indices = @transform_3, window_bounds = array<i64: 32, 64>}, {pipeline_mode = #tpu.pipeline_mode<synchronous>, transform_indices = @transform_4, window_bounds = array<i64: 16, 32>}, {pipeline_mode = #tpu.pipeline_mode<synchronous>, transform_indices = @transform_5, window_bounds = array<i64: 264, 1>}, {transform_indices = @transform_6, window_bounds = array<i64: 1, 128>}]} {
    %c0 = arith.constant 0 : index
    %c0_0 = arith.constant 0 : index
    %0 = vector.load %arg2[%c0, %c0_0] : memref<128x8xf32, #tpu.memory_space<vmem>>, vector<128x8xf32>
    %c0_1 = arith.constant 0 : index
    %c0_2 = arith.constant 0 : index
    %1 = vector.load %arg1[%c0_1, %c0_2] : memref<128x8xf32, #tpu.memory_space<vmem>>, vector<128x8xf32>
    %cst = arith.constant dense<0.000000e+00> : vector<128x128xf32>
    %2 = tpu.matmul %0, %1, %cst {dimension_numbers = #tpu.dot_dimension_numbers<[1], [1], [0], [0], [0, 0, 1, 0], [], []>} : vector<128x8xf32>, vector<128x8xf32>, vector<128x128xf32> -> vector<128x128xf32>
    %c0_3 = arith.constant 0 : index
    %c0_4 = arith.constant 0 : index
    %3 = vector.load %arg6[%c0_3, %c0_4] : memref<264x1xf32, #tpu.memory_space<vmem>>, vector<128x1xf32>
    %4 = vector.broadcast %3 : vector<128x1xf32> to vector<128x128xf32>
    %5 = arith.addf %2, %4 : vector<128x128xf32>
    %cst_5 = arith.constant 0.000000e+00 : f32
    %6 = vector.broadcast %cst_5 : f32 to vector<128x128xf32>
    %7 = arith.maximumf %5, %6 : vector<128x128xf32>
    %c0_6 = arith.constant 0 : index
    %c0_7 = arith.constant 0 : index
    %8 = vector.load %arg3[%c0_6, %c0_7] : memref<64x128xf32, #tpu.memory_space<vmem>>, vector<64x128xf32>
    %cst_8 = arith.constant dense<0.000000e+00> : vector<64x128xf32>
    %9 = tpu.matmul %8, %7, %cst_8 {dimension_numbers = #tpu.dot_dimension_numbers<[1], [0], [0], [1], [0, 0, 1, 1], [], []>} : vector<64x128xf32>, vector<128x128xf32>, vector<64x128xf32> -> vector<64x128xf32>
    %c128 = arith.constant 128 : index
    %c0_9 = arith.constant 0 : index
    %10 = vector.load %arg6[%c128, %c0_9] : memref<264x1xf32, #tpu.memory_space<vmem>>, vector<64x1xf32>
    %11 = vector.broadcast %10 : vector<64x1xf32> to vector<64x128xf32>
    %12 = arith.addf %9, %11 : vector<64x128xf32>
    %cst_10 = arith.constant 0.000000e+00 : f32
    %13 = vector.broadcast %cst_10 : f32 to vector<64x128xf32>
    %14 = arith.maximumf %12, %13 : vector<64x128xf32>
    %c0_11 = arith.constant 0 : index
    %c0_12 = arith.constant 0 : index
    %15 = vector.load %arg4[%c0_11, %c0_12] : memref<32x64xf32, #tpu.memory_space<vmem>>, vector<32x64xf32>
    %cst_13 = arith.constant dense<0.000000e+00> : vector<32x128xf32>
    %16 = tpu.matmul %15, %14, %cst_13 {dimension_numbers = #tpu.dot_dimension_numbers<[1], [0], [0], [1], [0, 0, 1, 1], [], []>} : vector<32x64xf32>, vector<64x128xf32>, vector<32x128xf32> -> vector<32x128xf32>
    %c192 = arith.constant 192 : index
    %c0_14 = arith.constant 0 : index
    %17 = vector.load %arg6[%c192, %c0_14] : memref<264x1xf32, #tpu.memory_space<vmem>>, vector<32x1xf32>
    %18 = vector.broadcast %17 : vector<32x1xf32> to vector<32x128xf32>
    %19 = arith.addf %16, %18 : vector<32x128xf32>
    %cst_15 = arith.constant 0.000000e+00 : f32
    %20 = vector.broadcast %cst_15 : f32 to vector<32x128xf32>
    %21 = arith.maximumf %19, %20 : vector<32x128xf32>
    %c0_16 = arith.constant 0 : index
    %c0_17 = arith.constant 0 : index
    %22 = vector.load %arg5[%c0_16, %c0_17] : memref<16x32xf32, #tpu.memory_space<vmem>>, vector<16x32xf32>
    %cst_18 = arith.constant dense<0.000000e+00> : vector<16x128xf32>
    %23 = tpu.matmul %22, %21, %cst_18 {dimension_numbers = #tpu.dot_dimension_numbers<[1], [0], [0], [1], [0, 0, 1, 1], [], []>} : vector<16x32xf32>, vector<32x128xf32>, vector<16x128xf32> -> vector<16x128xf32>
    %c224 = arith.constant 224 : index
    %c0_19 = arith.constant 0 : index
    %24 = vector.load %arg6[%c224, %c0_19] : memref<264x1xf32, #tpu.memory_space<vmem>>, vector<16x1xf32>
    %25 = vector.broadcast %24 : vector<16x1xf32> to vector<16x128xf32>
    %26 = arith.addf %23, %25 : vector<16x128xf32>
    %cst_20 = arith.constant 0.000000e+00 : f32
    %27 = vector.broadcast %cst_20 : f32 to vector<16x128xf32>
    %28 = arith.maximumf %26, %27 : vector<16x128xf32>
    %c240 = arith.constant 240 : index
    %c0_21 = arith.constant 0 : index
    %29 = vector.load %arg6[%c240, %c0_21] : memref<264x1xf32, #tpu.memory_space<vmem>>, vector<16x1xf32>
    %c256 = arith.constant 256 : index
    %c0_22 = arith.constant 0 : index
    %30 = vector.load %arg6[%c256, %c0_22] : memref<264x1xf32, #tpu.memory_space<vmem>>, vector<1x1xf32>
    %31 = vector.broadcast %29 : vector<16x1xf32> to vector<16x128xf32>
    %32 = arith.mulf %28, %31 : vector<16x128xf32>
    %cst_23 = arith.constant dense<0.000000e+00> : vector<128xf32>
    %33 = vector.multi_reduction <add>, %32, %cst_23 [0] : vector<16x128xf32> to vector<128xf32>
    %34 = vector.shape_cast %33 : vector<128xf32> to vector<1x128xf32>
    %35 = vector.broadcast %30 : vector<1x1xf32> to vector<1x128xf32>
    %36 = arith.addf %34, %35 : vector<1x128xf32>
    %cst_24 = arith.constant 5.000000e-01 : f32
    %37 = vector.broadcast %cst_24 : f32 to vector<1x128xf32>
    %38 = arith.mulf %37, %36 : vector<1x128xf32>
    %39 = math.tanh %38 : vector<1x128xf32>
    %cst_25 = arith.constant 1.000000e+00 : f32
    %40 = vector.broadcast %cst_25 : f32 to vector<1x128xf32>
    %41 = arith.addf %40, %39 : vector<1x128xf32>
    %cst_26 = arith.constant 5.000000e-01 : f32
    %42 = vector.broadcast %cst_26 : f32 to vector<1x128xf32>
    %43 = arith.mulf %42, %41 : vector<1x128xf32>
    %c0_27 = arith.constant 0 : index
    %c0_28 = arith.constant 0 : index
    %44 = vector.load %arg7[%c0_27, %c0_28] : memref<1x128xf32, #tpu.memory_space<vmem>>, vector<1x128xf32>
    tpu.vector_store %arg7[%c0_27, %c0_28], %43 {strides = array<i32>} : memref<1x128xf32, #tpu.memory_space<vmem>>, vector<1x128xf32>,
    return
  }
  func.func @transform_0(%arg0: i32) -> (i32, i32) {
    %c0_i32 = arith.constant 0 : i32
    %c0_i32_0 = arith.constant 0 : i32
    return %arg0, %c0_i32 : i32, i32
  }
  func.func @transform_1(%arg0: i32) -> (i32, i32) {
    %c0_i32 = arith.constant 0 : i32
    %c0_i32_0 = arith.constant 0 : i32
    %c0_i32_1 = arith.constant 0 : i32
    return %c0_i32, %c0_i32_0 : i32, i32
  }
  func.func @transform_2(%arg0: i32) -> (i32, i32) {
    %c0_i32 = arith.constant 0 : i32
    %c0_i32_0 = arith.constant 0 : i32
    %c0_i32_1 = arith.constant 0 : i32
    return %c0_i32, %c0_i32_0 : i32, i32
  }
  func.func @transform_3(%arg0: i32) -> (i32, i32) {
    %c0_i32 = arith.constant 0 : i32
    %c0_i32_0 = arith.constant 0 : i32
    %c0_i32_1 = arith.constant 0 : i32
    return %c0_i32, %c0_i32_0 : i32, i32
  }
  func.func @transform_4(%arg0: i32) -> (i32, i32) {
    %c0_i32 = arith.constant 0 : i32
    %c0_i32_0 = arith.constant 0 : i32
    %c0_i32_1 = arith.constant 0 : i32
    return %c0_i32, %c0_i32_0 : i32, i32
  }
  func.func @transform_5(%arg0: i32) -> (i32, i32) {
    %c0_i32 = arith.constant 0 : i32
    %c0_i32_0 = arith.constant 0 : i32
    %c0_i32_1 = arith.constant 0 : i32
    return %c0_i32, %c0_i32_0 : i32, i32
  }
  func.func @transform_6(%arg0: i32) -> (i32, i32) {
    %c0_i32 = arith.constant 0 : i32
    %c0_i32_0 = arith.constant 0 : i32
    return %c0_i32, %arg0 : i32, i32
  }
}

</mosaic_0001>

<llo_original>
// kernel: titanic_nn_forward.1
$region0: #{titanic_nn_forward.1}
  #allocation0 [shape = 'u32[]', space=smem, size = 0x4, offset = 0x4, fixed_abs, tag = 'smem constant byte address 0x4 - core index']
  #allocation1 [shape = 'u32[144,128]{1,0:T(1,128)}', space=vmem, size = 0x12000, scoped, tag = 'internal scratch']
  %s0 = inlined_call_operand.vmem [shape: f32[128,8], index: 0, kind: input, shape index: {}]
  %s1 = inlined_call_operand.vmem [shape: f32[128,8], index: 1, kind: input, shape index: {}]
  %s2 = inlined_call_operand.vmem [shape: f32[64,128], index: 2, kind: input, shape index: {}]
  %s3 = inlined_call_operand.vmem [shape: f32[32,64], index: 3, kind: input, shape index: {}]
  %s4 = inlined_call_operand.vmem [shape: f32[16,32], index: 4, kind: input, shape index: {}]
  %s5 = inlined_call_operand.vmem [shape: f32[264,1], index: 5, kind: input, shape index: {}]
  %s6 = inlined_call_operand.vmem [shape: f32[1,128], index: 6, kind: output, shape index: {}]
  %s7 = sld [smem:[#allocation0]]
  $region34: #{titanic_nn_forward.1} parent=0
    _
  %s9 = ssub.s32 1, %s7
  %s10 = scalar_select 0, %s9, %s7
  // Predicated region
  $region2: #{titanic_nn_forward.1} parent=0 // pred_check
    _
  $region3: #{titanic_nn_forward.1} parent=0 // pred_check_branch
    %12 = sbr.rel (0) target = $region5
  $region4: #{titanic_nn_forward.1} parent=0 // pred_region
    _
  $region5: #{titanic_nn_forward.1} parent=0 // pred_fallthru
    _
  // Predicated region
  $region6: #{titanic_nn_forward.1} parent=0 // pred_check
    _
  $region7: #{titanic_nn_forward.1} parent=0 // pred_check_branch
    %14 = sbr.rel (0) target = $region9
  $region8: #{titanic_nn_forward.1} parent=0 // pred_region
    _
  $region9: #{titanic_nn_forward.1} parent=0 // pred_fallthru
    _
  // Predicated region
  $region10: #{titanic_nn_forward.1} parent=0 // pred_check
    _
  $region11: #{titanic_nn_forward.1} parent=0 // pred_check_branch
    %16 = sbr.rel (0) target = $region13
  $region12: #{titanic_nn_forward.1} parent=0 // pred_region
    _
  $region13: #{titanic_nn_forward.1} parent=0 // pred_fallthru
    _
  // Predicated region
  $region14: #{titanic_nn_forward.1} parent=0 // pred_check
    _
  $region15: #{titanic_nn_forward.1} parent=0 // pred_check_branch
    %18 = sbr.rel (0) target = $region17
  $region16: #{titanic_nn_forward.1} parent=0 // pred_region
    _
  $region17: #{titanic_nn_forward.1} parent=0 // pred_fallthru
    _
  // Predicated region
  $region18: #{titanic_nn_forward.1} parent=0 // pred_check
    _
  $region19: #{titanic_nn_forward.1} parent=0 // pred_check_branch
    %20 = sbr.rel (0) target = $region21
  $region20: #{titanic_nn_forward.1} parent=0 // pred_region
    _
  $region21: #{titanic_nn_forward.1} parent=0 // pred_fallthru
    _
  // Predicated region
  $region22: #{titanic_nn_forward.1} parent=0 // pred_check
    _
  $region23: #{titanic_nn_forward.1} parent=0 // pred_check_branch
    %22 = sbr.rel (0) target = $region25
  $region24: #{titanic_nn_forward.1} parent=0 // pred_region
    _
  $region25: #{titanic_nn_forward.1} parent=0 // pred_fallthru
    _
  %v23 = vld [vmem:[%s1] sm:$0xff]
  %v24 = vld [vmem:[%s1 + $0x8] sm:$0xff]
  %v25 = vld [vmem:[%s1 + $0x10] sm:$0xff]
  %v26 = vld [vmem:[%s1 + $0x18] sm:$0xff]
  %v27 = vld [vmem:[%s1 + $0x20] sm:$0xff]
  %v28 = vld [vmem:[%s1 + $0x28] sm:$0xff]
  %v29 = vld [vmem:[%s1 + $0x30] sm:$0xff]
  %v30 = vld [vmem:[%s1 + $0x38] sm:$0xff]
  %v31 = vld [vmem:[%s1 + $0x40] sm:$0xff]
  %v32 = vld [vmem:[%s1 + $0x48] sm:$0xff]
  %v33 = vld [vmem:[%s1 + $0x50] sm:$0xff]
  %v34 = vld [vmem:[%s1 + $0x58] sm:$0xff]
  %v35 = vld [vmem:[%s1 + $0x60] sm:$0xff]
  %v36 = vld [vmem:[%s1 + $0x68] sm:$0xff]
  %v37 = vld [vmem:[%s1 + $0x70] sm:$0xff]
  %v38 = vld [vmem:[%s1 + $0x78] sm:$0xff]
  %v39 = vld [vmem:[%s0] sm:$0xff]
  %v40 = vld [vmem:[%s0 + $0x8] sm:$0xff]
  %v41 = vld [vmem:[%s0 + $0x10] sm:$0xff]
  %v42 = vld [vmem:[%s0 + $0x18] sm:$0xff]
  %v43 = vld [vmem:[%s0 + $0x20] sm:$0xff]
  %v44 = vld [vmem:[%s0 + $0x28] sm:$0xff]
  %v45 = vld [vmem:[%s0 + $0x30] sm:$0xff]
  %v46 = vld [vmem:[%s0 + $0x38] sm:$0xff]
  %v47 = vld [vmem:[%s0 + $0x40] sm:$0xff]
  %v48 = vld [vmem:[%s0 + $0x48] sm:$0xff]
  %v49 = vld [vmem:[%s0 + $0x50] sm:$0xff]
  %v50 = vld [vmem:[%s0 + $0x58] sm:$0xff]
  %v51 = vld [vmem:[%s0 + $0x60] sm:$0xff]
  %v52 = vld [vmem:[%s0 + $0x68] sm:$0xff]
  %v53 = vld [vmem:[%s0 + $0x70] sm:$0xff]
  %v54 = vld [vmem:[%s0 + $0x78] sm:$0xff]
  %v55 = vld [vmem:[%s5] sm:$0xff]
  %v56 = vld [vmem:[%s5 + $0x8] sm:$0xff]
  %v57 = vld [vmem:[%s5 + $0x10] sm:$0xff]
  %v58 = vld [vmem:[%s5 + $0x18] sm:$0xff]
  %v59 = vld [vmem:[%s5 + $0x20] sm:$0xff]
  %v60 = vld [vmem:[%s5 + $0x28] sm:$0xff]
  %v61 = vld [vmem:[%s5 + $0x30] sm:$0xff]
  %v62 = vld [vmem:[%s5 + $0x38] sm:$0xff]
  %v63 = vld [vmem:[%s5 + $0x40] sm:$0xff]
  %v64 = vld [vmem:[%s5 + $0x48] sm:$0xff]
  %v65 = vld [vmem:[%s5 + $0x50] sm:$0xff]
  %v66 = vld [vmem:[%s5 + $0x58] sm:$0xff]
  %v67 = vld [vmem:[%s5 + $0x60] sm:$0xff]
  %v68 = vld [vmem:[%s5 + $0x68] sm:$0xff]
  %v69 = vld [vmem:[%s5 + $0x70] sm:$0xff]
  %v70 = vld [vmem:[%s5 + $0x78] sm:$0xff]
  %72 = vset.pattern.permute.xlu0 0
  %73 = vperm.xlu0 %72, %v55
  %v74 = vpop.permute.xlu0 %73
  %77 = vset.pattern.permute.xlu0 0
  %78 = vperm.xlu0 %77, %v56
  %v79 = vpop.permute.xlu0 %78
  %82 = vset.pattern.permute.xlu0 0
  %83 = vperm.xlu0 %82, %v57
  %v84 = vpop.permute.xlu0 %83
  %87 = vset.pattern.permute.xlu0 0
  %88 = vperm.xlu0 %87, %v58
  %v89 = vpop.permute.xlu0 %88
  %92 = vset.pattern.permute.xlu0 0
  %93 = vperm.xlu0 %92, %v59
  %v94 = vpop.permute.xlu0 %93
  %97 = vset.pattern.permute.xlu0 0
  %98 = vperm.xlu0 %97, %v60
  %v99 = vpop.permute.xlu0 %98
  %102 = vset.pattern.permute.xlu0 0
  %103 = vperm.xlu0 %102, %v61
  %v104 = vpop.permute.xlu0 %103
  %107 = vset.pattern.permute.xlu0 0
  %108 = vperm.xlu0 %107, %v62
  %v109 = vpop.permute.xlu0 %108
  %112 = vset.pattern.permute.xlu0 0
  %113 = vperm.xlu0 %112, %v63
  %v114 = vpop.permute.xlu0 %113
  %117 = vset.pattern.permute.xlu0 0
  %118 = vperm.xlu0 %117, %v64
  %v119 = vpop.permute.xlu0 %118
  %122 = vset.pattern.permute.xlu0 0
  %123 = vperm.xlu0 %122, %v65
  %v124 = vpop.permute.xlu0 %123
  %127 = vset.pattern.permute.xlu0 0
  %128 = vperm.xlu0 %127, %v66
  %v129 = vpop.permute.xlu0 %128
  %132 = vset.pattern.permute.xlu0 0
  %133 = vperm.xlu0 %132, %v67
  %v134 = vpop.permute.xlu0 %133
  %137 = vset.pattern.permute.xlu0 0
  %138 = vperm.xlu0 %137, %v68
  %v139 = vpop.permute.xlu0 %138
  %142 = vset.pattern.permute.xlu0 0
  %143 = vperm.xlu0 %142, %v69
  %v144 = vpop.permute.xlu0 %143
  %147 = vset.pattern.permute.xlu0 0
  %148 = vperm.xlu0 %147, %v70
  %v149 = vpop.permute.xlu0 %148
  %vm151 = vcmask 64512
  %v153 = vsel %vm151, %v23, 0
  %v156 = vsel %vm151, %v24, 0
  %v159 = vsel %vm151, %v25, 0
  %v162 = vsel %vm151, %v26, 0
  %v165 = vsel %vm151, %v27, 0
  %v168 = vsel %vm151, %v28, 0
  %v171 = vsel %vm151, %v29, 0
  %v174 = vsel %vm151, %v30, 0
  %v177 = vsel %vm151, %v31, 0
  %v180 = vsel %vm151, %v32, 0
  %v183 = vsel %vm151, %v33, 0
  %v186 = vsel %vm151, %v34, 0
  %v189 = vsel %vm151, %v35, 0
  %v192 = vsel %vm151, %v36, 0
  %v195 = vsel %vm151, %v37, 0
  %v198 = vsel %vm151, %v38, 0
  %v201 = vsel %vm151, %v39, 0
  %v204 = vsel %vm151, %v40, 0
  %v207 = vsel %vm151, %v41, 0
  %v210 = vsel %vm151, %v42, 0
  %v213 = vsel %vm151, %v43, 0
  %v216 = vsel %vm151, %v44, 0
  %v219 = vsel %vm151, %v45, 0
  %v222 = vsel %vm151, %v46, 0
  %v225 = vsel %vm151, %v47, 0
  %v228 = vsel %vm151, %v48, 0
  %v231 = vsel %vm151, %v49, 0
  %v234 = vsel %vm151, %v50, 0
  %v237 = vsel %vm151, %v51, 0
  %v240 = vsel %vm151, %v52, 0
  %v243 = vsel %vm151, %v53, 0
  %v246 = vsel %vm151, %v54, 0
  %248 = vmatprep.subr.mxu0 0.0
  %249 = vmatpush1.xpose.msra.mxu0 %v201
  %250 = vmatprep.subr.mxu0 0.0
  %251 = vmatpush1.xpose.msra.mxu0 %v204
  %252 = vmatprep.subr.mxu0 0.0
  %253 = vmatpush1.xpose.msra.mxu0 %v207
  %254 = vmatprep.subr.mxu0 0.0
  %255 = vmatpush1.xpose.msra.mxu0 %v210
  %256 = vmatprep.subr.mxu0 0.0
  %257 = vmatpush1.xpose.msra.mxu0 %v213
  %258 = vmatprep.subr.mxu0 0.0
  %259 = vmatpush1.xpose.msra.mxu0 %v216
  %260 = vmatprep.subr.mxu0 0.0
  %261 = vmatpush1.xpose.msra.mxu0 %v219
  %262 = vmatprep.subr.mxu0 0.0
  %263 = vmatpush1.xpose.msra.mxu0 %v222
  %264 = vmatprep.subr.mxu0 0.0
  %265 = vmatpush1.xpose.msra.mxu0 %v225
  %266 = vmatprep.subr.mxu0 0.0
  %267 = vmatpush1.xpose.msra.mxu0 %v228
  %268 = vmatprep.subr.mxu0 0.0
  %269 = vmatpush1.xpose.msra.mxu0 %v231
  %270 = vmatprep.subr.mxu0 0.0
  %271 = vmatpush1.xpose.msra.mxu0 %v234
  %272 = vmatprep.subr.mxu0 0.0
  %273 = vmatpush1.xpose.msra.mxu0 %v237
  %274 = vmatprep.subr.mxu0 0.0
  %275 = vmatpush1.xpose.msra.mxu0 %v240
  %276 = vmatprep.subr.mxu0 0.0
  %277 = vmatpush1.xpose.msra.mxu0 %v243
  %278 = vmatprep.subr.mxu0 0.0
  %279 = vmatpush1.xpose.msra.mxu0 %v246
  %280 = vmatprep.subr.mxu0 0.0
  %281 = vmatpush1.xpose.msra.mxu0 0.0
  %282 = vmatprep.subr.mxu0 0.0
  %283 = vmatpush1.xpose.msra.mxu0 0.0
  %284 = vmatprep.subr.mxu0 0.0
  %285 = vmatpush1.xpose.msra.mxu0 0.0
  %286 = vmatprep.subr.mxu0 0.0
  %287 = vmatpush1.xpose.msra.mxu0 0.0
  %288 = vmatprep.subr.mxu0 0.0
  %289 = vmatpush1.xpose.msra.mxu0 0.0
  %290 = vmatprep.subr.mxu0 0.0
  %291 = vmatpush1.xpose.msra.mxu0 0.0
  %292 = vmatprep.subr.mxu0 0.0
  %293 = vmatpush1.xpose.msra.mxu0 0.0
  %294 = vmatprep.subr.mxu0 0.0
  %295 = vmatpush1.xpose.msra.mxu0 0.0
  %296 = vmatprep.subr.mxu0 0.0
  %297 = vmatpush1.xpose.msra.mxu0 0.0
  %298 = vmatprep.subr.mxu0 0.0
  %299 = vmatpush1.xpose.msra.mxu0 0.0
  %300 = vmatprep.subr.mxu0 0.0
  %301 = vmatpush1.xpose.msra.mxu0 0.0
  %302 = vmatprep.subr.mxu0 0.0
  %303 = vmatpush1.xpose.msra.mxu0 0.0
  %304 = vmatprep.subr.mxu0 0.0
  %305 = vmatpush1.xpose.msra.mxu0 0.0
  %306 = vmatprep.subr.mxu0 0.0
  %307 = vmatpush1.xpose.msra.mxu0 0.0
  %308 = vmatprep.subr.mxu0 0.0
  %309 = vmatpush1.xpose.msra.mxu0 0.0
  %310 = vmatprep.subr.mxu0 0.0
  %311 = vmatpush1.xpose.msra.mxu0 0.0
  %312 = vmatprep.mubr.f32.mxu0 0.0
  %313 = vmatmul.mubr.f32.gmra.mrb[0].mxu0 %v153
  %v314 = vpop.f32.mrb[0].mxu0
  %v315 = vadd.f32 %v74, %v314
  %v316 = vpop.f32.mrb[0].mxu0
  %317 = vmatprep.mubr.f32.mxu0 0.0
  %318 = vmatmul.mubr.f32.gmra.mrb[0].mxu0 %v156
  %v319 = vpop.f32.mrb[0].mxu0
  %v320 = vadd.f32 %v79, %v319
  %v321 = vpop.f32.mrb[0].mxu0
  %322 = vmatprep.mubr.f32.mxu0 0.0
  %323 = vmatmul.mubr.f32.gmra.mrb[0].mxu0 %v159
  %v324 = vpop.f32.mrb[0].mxu0
  %v325 = vadd.f32 %v84, %v324
  %v326 = vpop.f32.mrb[0].mxu0
  %327 = vmatprep.mubr.f32.mxu0 0.0
  %328 = vmatmul.mubr.f32.gmra.mrb[0].mxu0 %v162
  %v329 = vpop.f32.mrb[0].mxu0
  %v330 = vadd.f32 %v89, %v329
  %v331 = vpop.f32.mrb[0].mxu0
  %332 = vmatprep.mubr.f32.mxu0 0.0
  %333 = vmatmul.mubr.f32.gmra.mrb[0].mxu0 %v165
  %v334 = vpop.f32.mrb[0].mxu0
  %v335 = vadd.f32 %v94, %v334
  %v336 = vpop.f32.mrb[0].mxu0
  %337 = vmatprep.mubr.f32.mxu0 0.0
  %338 = vmatmul.mubr.f32.gmra.mrb[0].mxu0 %v168
  %v339 = vpop.f32.mrb[0].mxu0
  %v340 = vadd.f32 %v99, %v339
  %v341 = vpop.f32.mrb[0].mxu0
  %342 = vmatprep.mubr.f32.mxu0 0.0
  %343 = vmatmul.mubr.f32.gmra.mrb[0].mxu0 %v171
  %v344 = vpop.f32.mrb[0].mxu0
  %v345 = vadd.f32 %v104, %v344
  %v346 = vpop.f32.mrb[0].mxu0
  %347 = vmatprep.mubr.f32.mxu0 0.0
  %348 = vmatmul.mubr.f32.gmra.mrb[0].mxu0 %v174
  %v349 = vpop.f32.mrb[0].mxu0
  %v350 = vadd.f32 %v109, %v349
  %v351 = vpop.f32.mrb[0].mxu0
  %352 = vmatprep.mubr.f32.mxu0 0.0
  %353 = vmatmul.mubr.f32.gmra.mrb[0].mxu0 %v177
  %v354 = vpop.f32.mrb[0].mxu0
  %v355 = vadd.f32 %v114, %v354
  %v356 = vpop.f32.mrb[0].mxu0
  %357 = vmatprep.mubr.f32.mxu0 0.0
  %358 = vmatmul.mubr.f32.gmra.mrb[0].mxu0 %v180
  %v359 = vpop.f32.mrb[0].mxu0
  %v360 = vadd.f32 %v119, %v359
  %v361 = vpop.f32.mrb[0].mxu0
  %362 = vmatprep.mubr.f32.mxu0 0.0
  %363 = vmatmul.mubr.f32.gmra.mrb[0].mxu0 %v183
  %v364 = vpop.f32.mrb[0].mxu0
  %v365 = vadd.f32 %v124, %v364
  %v366 = vpop.f32.mrb[0].mxu0
  %367 = vmatprep.mubr.f32.mxu0 0.0
  %368 = vmatmul.mubr.f32.gmra.mrb[0].mxu0 %v186
  %v369 = vpop.f32.mrb[0].mxu0
  %v370 = vadd.f32 %v129, %v369
  %v371 = vpop.f32.mrb[0].mxu0
  %372 = vmatprep.mubr.f32.mxu0 0.0
  %373 = vmatmul.mubr.f32.gmra.mrb[0].mxu0 %v189
  %v374 = vpop.f32.mrb[0].mxu0
  %v375 = vadd.f32 %v134, %v374
  %v376 = vpop.f32.mrb[0].mxu0
  %377 = vmatprep.mubr.f32.mxu0 0.0
  %378 = vmatmul.mubr.f32.gmra.mrb[0].mxu0 %v192
  %v379 = vpop.f32.mrb[0].mxu0
  %v380 = vadd.f32 %v139, %v379
  %v381 = vpop.f32.mrb[0].mxu0
  %382 = vmatprep.mubr.f32.mxu0 0.0
  %383 = vmatmul.mubr.f32.gmra.mrb[0].mxu0 %v195
  %v384 = vpop.f32.mrb[0].mxu0
  %v385 = vadd.f32 %v144, %v384
  %v386 = vpop.f32.mrb[0].mxu0
  %387 = vmatprep.mubr.f32.mxu0 0.0
  %388 = vmatmul.mubr.f32.gmra.mrb[0].mxu0 %v198
  %v389 = vpop.f32.mrb[0].mxu0
  %v390 = vadd.f32 %v149, %v389
  %v391 = vpop.f32.mrb[0].mxu0
  %392 = vdwg.mxu0
  %v393 = vmax.f32 %v315, 0.0
  %v394 = vmax.f32 %v320, 0.0
  %v395 = vmax.f32 %v325, 0.0
  %v396 = vmax.f32 %v330, 0.0
  %v397 = vmax.f32 %v335, 0.0
  %v398 = vmax.f32 %v340, 0.0
  %v399 = vmax.f32 %v345, 0.0
  %v400 = vmax.f32 %v350, 0.0
  %v401 = vmax.f32 %v355, 0.0
  %v402 = vmax.f32 %v360, 0.0
  %v403 = vmax.f32 %v365, 0.0
  %v404 = vmax.f32 %v370, 0.0
  %v405 = vmax.f32 %v375, 0.0
  %v406 = vmax.f32 %v380, 0.0
  %v407 = vmax.f32 %v385, 0.0
  %v408 = vmax.f32 %v390, 0.0
  %v409 = vld [vmem:[%s2] sm:$0xff]
  %v410 = vld [vmem:[%s2 + $0x8] sm:$0xff]
  %v411 = vld [vmem:[%s2 + $0x10] sm:$0xff]
  %v412 = vld [vmem:[%s2 + $0x18] sm:$0xff]
  %v413 = vld [vmem:[%s2 + $0x20] sm:$0xff]
  %v414 = vld [vmem:[%s2 + $0x28] sm:$0xff]
  %v415 = vld [vmem:[%s2 + $0x30] sm:$0xff]
  %v416 = vld [vmem:[%s2 + $0x38] sm:$0xff]
  %v417 = vld [vmem:[%s5 + $0x80] sm:$0xff]
  %v418 = vld [vmem:[%s5 + $0x88] sm:$0xff]
  %v419 = vld [vmem:[%s5 + $0x90] sm:$0xff]
  %v420 = vld [vmem:[%s5 + $0x98] sm:$0xff]
  %v421 = vld [vmem:[%s5 + $0xa0] sm:$0xff]
  %v422 = vld [vmem:[%s5 + $0xa8] sm:$0xff]
  %v423 = vld [vmem:[%s5 + $0xb0] sm:$0xff]
  %v424 = vld [vmem:[%s5 + $0xb8] sm:$0xff]
  %426 = vset.pattern.permute.xlu0 0
  %427 = vperm.xlu0 %426, %v417
  %v428 = vpop.permute.xlu0 %427
  %431 = vset.pattern.permute.xlu0 0
  %432 = vperm.xlu0 %431, %v418
  %v433 = vpop.permute.xlu0 %432
  %436 = vset.pattern.permute.xlu0 0
  %437 = vperm.xlu0 %436, %v419
  %v438 = vpop.permute.xlu0 %437
  %441 = vset.pattern.permute.xlu0 0
  %442 = vperm.xlu0 %441, %v420
  %v443 = vpop.permute.xlu0 %442
  %446 = vset.pattern.permute.xlu0 0
  %447 = vperm.xlu0 %446, %v421
  %v448 = vpop.permute.xlu0 %447
  %451 = vset.pattern.permute.xlu0 0
  %452 = vperm.xlu0 %451, %v422
  %v453 = vpop.permute.xlu0 %452
  %456 = vset.pattern.permute.xlu0 0
  %457 = vperm.xlu0 %456, %v423
  %v458 = vpop.permute.xlu0 %457
  %461 = vset.pattern.permute.xlu0 0
  %462 = vperm.xlu0 %461, %v424
  %v463 = vpop.permute.xlu0 %462
  %465 = vmatprep.subr.mxu0 0.0
  %466 = vmatpush1.msra.mxu0 %v393
  %467 = vmatprep.subr.mxu0 0.0
  %468 = vmatpush1.msra.mxu0 %v394
  %469 = vmatprep.subr.mxu0 0.0
  %470 = vmatpush1.msra.mxu0 %v395
  %471 = vmatprep.subr.mxu0 0.0
  %472 = vmatpush1.msra.mxu0 %v396
  %473 = vmatprep.subr.mxu0 0.0
  %474 = vmatpush1.msra.mxu0 %v397
  %475 = vmatprep.subr.mxu0 0.0
  %476 = vmatpush1.msra.mxu0 %v398
  %477 = vmatprep.subr.mxu0 0.0
  %478 = vmatpush1.msra.mxu0 %v399
  %479 = vmatprep.subr.mxu0 0.0
  %480 = vmatpush1.msra.mxu0 %v400
  %481 = vmatprep.subr.mxu0 0.0
  %482 = vmatpush1.msra.mxu0 %v401
  %483 = vmatprep.subr.mxu0 0.0
  %484 = vmatpush1.msra.mxu0 %v402
  %485 = vmatprep.subr.mxu0 0.0
  %486 = vmatpush1.msra.mxu0 %v403
  %487 = vmatprep.subr.mxu0 0.0
  %488 = vmatpush1.msra.mxu0 %v404
  %489 = vmatprep.subr.mxu0 0.0
  %490 = vmatpush1.msra.mxu0 %v405
  %491 = vmatprep.subr.mxu0 0.0
  %492 = vmatpush1.msra.mxu0 %v406
  %493 = vmatprep.subr.mxu0 0.0
  %494 = vmatpush1.msra.mxu0 %v407
  %495 = vmatprep.subr.mxu0 0.0
  %496 = vmatpush1.msra.mxu0 %v408
  %497 = vmatprep.subr.mxu0 0.0
  %498 = vmatpush1.msra.mxu0 0.0
  %499 = vmatprep.subr.mxu0 0.0
  %500 = vmatpush1.msra.mxu0 0.0
  %501 = vmatprep.subr.mxu0 0.0
  %502 = vmatpush1.msra.mxu0 0.0
  %503 = vmatprep.subr.mxu0 0.0
  %504 = vmatpush1.msra.mxu0 0.0
  %505 = vmatprep.subr.mxu0 0.0
  %506 = vmatpush1.msra.mxu0 0.0
  %507 = vmatprep.subr.mxu0 0.0
  %508 = vmatpush1.msra.mxu0 0.0
  %509 = vmatprep.subr.mxu0 0.0
  %510 = vmatpush1.msra.mxu0 0.0
  %511 = vmatprep.subr.mxu0 0.0
  %512 = vmatpush1.msra.mxu0 0.0
  %513 = vmatprep.subr.mxu0 0.0
  %514 = vmatpush1.msra.mxu0 0.0
  %515 = vmatprep.subr.mxu0 0.0
  %516 = vmatpush1.msra.mxu0 0.0
  %517 = vmatprep.subr.mxu0 0.0
  %518 = vmatpush1.msra.mxu0 0.0
  %519 = vmatprep.subr.mxu0 0.0
  %520 = vmatpush1.msra.mxu0 0.0
  %521 = vmatprep.subr.mxu0 0.0
  %522 = vmatpush1.msra.mxu0 0.0
  %523 = vmatprep.subr.mxu0 0.0
  %524 = vmatpush1.msra.mxu0 0.0
  %525 = vmatprep.subr.mxu0 0.0
  %526 = vmatpush1.msra.mxu0 0.0
  %527 = vmatprep.subr.mxu0 0.0
  %528 = vmatpush1.msra.mxu0 0.0
  %529 = vmatprep.mubr.f32.mxu0 0.0
  %530 = vmatmul.mubr.f32.gmra.mrb[0].mxu0 %v409
  %v531 = vpop.f32.mrb[0].mxu0
  %v532 = vadd.f32 %v428, %v531
  %v533 = vpop.f32.mrb[0].mxu0
  %534 = vmatprep.mubr.f32.mxu0 0.0
  %535 = vmatmul.mubr.f32.gmra.mrb[0].mxu0 %v410
  %v536 = vpop.f32.mrb[0].mxu0
  %v537 = vadd.f32 %v433, %v536
  %v538 = vpop.f32.mrb[0].mxu0
  %539 = vmatprep.mubr.f32.mxu0 0.0
  %540 = vmatmul.mubr.f32.gmra.mrb[0].mxu0 %v411
  %v541 = vpop.f32.mrb[0].mxu0
  %v542 = vadd.f32 %v438, %v541
  %v543 = vpop.f32.mrb[0].mxu0
  %544 = vmatprep.mubr.f32.mxu0 0.0
  %545 = vmatmul.mubr.f32.gmra.mrb[0].mxu0 %v412
  %v546 = vpop.f32.mrb[0].mxu0
  %v547 = vadd.f32 %v443, %v546
  %v548 = vpop.f32.mrb[0].mxu0
  %549 = vmatprep.mubr.f32.mxu0 0.0
  %550 = vmatmul.mubr.f32.gmra.mrb[0].mxu0 %v413
  %v551 = vpop.f32.mrb[0].mxu0
  %v552 = vadd.f32 %v448, %v551
  %v553 = vpop.f32.mrb[0].mxu0
  %554 = vmatprep.mubr.f32.mxu0 0.0
  %555 = vmatmul.mubr.f32.gmra.mrb[0].mxu0 %v414
  %v556 = vpop.f32.mrb[0].mxu0
  %v557 = vadd.f32 %v453, %v556
  %v558 = vpop.f32.mrb[0].mxu0
  %559 = vmatprep.mubr.f32.mxu0 0.0
  %560 = vmatmul.mubr.f32.gmra.mrb[0].mxu0 %v415
  %v561 = vpop.f32.mrb[0].mxu0
  %v562 = vadd.f32 %v458, %v561
  %v563 = vpop.f32.mrb[0].mxu0
  %564 = vmatprep.mubr.f32.mxu0 0.0
  %565 = vmatmul.mubr.f32.gmra.mrb[0].mxu0 %v416
  %v566 = vpop.f32.mrb[0].mxu0
  %v567 = vadd.f32 %v463, %v566
  %v568 = vpop.f32.mrb[0].mxu0
  %569 = vdwg.mxu0
  %v570 = vmax.f32 %v532, 0.0
  %v571 = vmax.f32 %v537, 0.0
  %v572 = vmax.f32 %v542, 0.0
  %v573 = vmax.f32 %v547, 0.0
  %v574 = vmax.f32 %v552, 0.0
  %v575 = vmax.f32 %v557, 0.0
  %v576 = vmax.f32 %v562, 0.0
  %v577 = vmax.f32 %v567, 0.0
  %v578 = vld [vmem:[%s3] sm:$0xff]
  %v579 = vld [vmem:[%s3 + $0x8] sm:$0xff]
  %v580 = vld [vmem:[%s3 + $0x10] sm:$0xff]
  %v581 = vld [vmem:[%s3 + $0x18] sm:$0xff]
  %v582 = vld [vmem:[%s5 + $0xc0] sm:$0xff]
  %v583 = vld [vmem:[%s5 + $0xc8] sm:$0xff]
  %v584 = vld [vmem:[%s5 + $0xd0] sm:$0xff]
  %v585 = vld [vmem:[%s5 + $0xd8] sm:$0xff]
  %587 = vset.pattern.permute.xlu0 0
  %588 = vperm.xlu0 %587, %v582
  %v589 = vpop.permute.xlu0 %588
  %592 = vset.pattern.permute.xlu0 0
  %593 = vperm.xlu0 %592, %v583
  %v594 = vpop.permute.xlu0 %593
  %597 = vset.pattern.permute.xlu0 0
  %598 = vperm.xlu0 %597, %v584
  %v599 = vpop.permute.xlu0 %598
  %602 = vset.pattern.permute.xlu0 0
  %603 = vperm.xlu0 %602, %v585
  %v604 = vpop.permute.xlu0 %603
  %vm606 = vcmask 523264
  %v608 = vsel %vm606, %v578, 0
  %v611 = vsel %vm606, %v579, 0
  %v614 = vsel %vm606, %v580, 0
  %v617 = vsel %vm606, %v581, 0
  %619 = vmatprep.subr.mxu0 0.0
  %620 = vmatpush1.msra.mxu0 %v570
  %621 = vmatprep.subr.mxu0 0.0
  %622 = vmatpush1.msra.mxu0 %v571
  %623 = vmatprep.subr.mxu0 0.0
  %624 = vmatpush1.msra.mxu0 %v572
  %625 = vmatprep.subr.mxu0 0.0
  %626 = vmatpush1.msra.mxu0 %v573
  %627 = vmatprep.subr.mxu0 0.0
  %628 = vmatpush1.msra.mxu0 %v574
  %629 = vmatprep.subr.mxu0 0.0
  %630 = vmatpush1.msra.mxu0 %v575
  %631 = vmatprep.subr.mxu0 0.0
  %632 = vmatpush1.msra.mxu0 %v576
  %633 = vmatprep.subr.mxu0 0.0
  %634 = vmatpush1.msra.mxu0 %v577
  %635 = vmatprep.subr.mxu0 0.0
  %636 = vmatpush1.msra.mxu0 0.0
  %637 = vmatprep.subr.mxu0 0.0
  %638 = vmatpush1.msra.mxu0 0.0
  %639 = vmatprep.subr.mxu0 0.0
  %640 = vmatpush1.msra.mxu0 0.0
  %641 = vmatprep.subr.mxu0 0.0
  %642 = vmatpush1.msra.mxu0 0.0
  %643 = vmatprep.subr.mxu0 0.0
  %644 = vmatpush1.msra.mxu0 0.0
  %645 = vmatprep.subr.mxu0 0.0
  %646 = vmatpush1.msra.mxu0 0.0
  %647 = vmatprep.subr.mxu0 0.0
  %648 = vmatpush1.msra.mxu0 0.0
  %649 = vmatprep.subr.mxu0 0.0
  %650 = vmatpush1.msra.mxu0 0.0
  %651 = vmatprep.subr.mxu0 0.0
  %652 = vmatpush1.msra.mxu0 0.0
  %653 = vmatprep.subr.mxu0 0.0
  %654 = vmatpush1.msra.mxu0 0.0
  %655 = vmatprep.subr.mxu0 0.0
  %656 = vmatpush1.msra.mxu0 0.0
  %657 = vmatprep.subr.mxu0 0.0
  %658 = vmatpush1.msra.mxu0 0.0
  %659 = vmatprep.subr.mxu0 0.0
  %660 = vmatpush1.msra.mxu0 0.0
  %661 = vmatprep.subr.mxu0 0.0
  %662 = vmatpush1.msra.mxu0 0.0
  %663 = vmatprep.subr.mxu0 0.0
  %664 = vmatpush1.msra.mxu0 0.0
  %665 = vmatprep.subr.mxu0 0.0
  %666 = vmatpush1.msra.mxu0 0.0
  %667 = vmatprep.subr.mxu0 0.0
  %668 = vmatpush1.msra.mxu0 0.0
  %669 = vmatprep.subr.mxu0 0.0
  %670 = vmatpush1.msra.mxu0 0.0
  %671 = vmatprep.subr.mxu0 0.0
  %672 = vmatpush1.msra.mxu0 0.0
  %673 = vmatprep.subr.mxu0 0.0
  %674 = vmatpush1.msra.mxu0 0.0
  %675 = vmatprep.subr.mxu0 0.0
  %676 = vmatpush1.msra.mxu0 0.0
  %677 = vmatprep.subr.mxu0 0.0
  %678 = vmatpush1.msra.mxu0 0.0
  %679 = vmatprep.subr.mxu0 0.0
  %680 = vmatpush1.msra.mxu0 0.0
  %681 = vmatprep.subr.mxu0 0.0
  %682 = vmatpush1.msra.mxu0 0.0
  %683 = vmatprep.mubr.f32.mxu0 0.0
  %684 = vmatmul.mubr.f32.gmra.mrb[0].mxu0 %v608
  %v685 = vpop.f32.mrb[0].mxu0
  %v686 = vadd.f32 %v589, %v685
  %v687 = vpop.f32.mrb[0].mxu0
  %688 = vmatprep.mubr.f32.mxu0 0.0
  %689 = vmatmul.mubr.f32.gmra.mrb[0].mxu0 %v611
  %v690 = vpop.f32.mrb[0].mxu0
  %v691 = vadd.f32 %v594, %v690
  %v692 = vpop.f32.mrb[0].mxu0
  %693 = vmatprep.mubr.f32.mxu0 0.0
  %694 = vmatmul.mubr.f32.gmra.mrb[0].mxu0 %v614
  %v695 = vpop.f32.mrb[0].mxu0
  %v696 = vadd.f32 %v599, %v695
  %v697 = vpop.f32.mrb[0].mxu0
  %698 = vmatprep.mubr.f32.mxu0 0.0
  %699 = vmatmul.mubr.f32.gmra.mrb[0].mxu0 %v617
  %v700 = vpop.f32.mrb[0].mxu0
  %v701 = vadd.f32 %v604, %v700
  %v702 = vpop.f32.mrb[0].mxu0
  %703 = vdwg.mxu0
  %v704 = vmax.f32 %v686, 0.0
  %v705 = vmax.f32 %v691, 0.0
  %v706 = vmax.f32 %v696, 0.0
  %v707 = vmax.f32 %v701, 0.0
  %v708 = vld [vmem:[%s4] sm:$0xff]
  %v709 = vld [vmem:[%s4 + $0x8] sm:$0xff]
  %v710 = vld [vmem:[%s5 + $0xe0] sm:$0xff]
  %v711 = vld [vmem:[%s5 + $0xe8] sm:$0xff]
  %713 = vset.pattern.permute.xlu0 0
  %714 = vperm.xlu0 %713, %v710
  %v715 = vpop.permute.xlu0 %714
  %718 = vset.pattern.permute.xlu0 0
  %719 = vperm.xlu0 %718, %v711
  %v720 = vpop.permute.xlu0 %719
  %vm722 = vcmask 261120
  %v724 = vsel %vm722, %v708, 0
  %v727 = vsel %vm722, %v709, 0
  %729 = vmatprep.subr.mxu0 0.0
  %730 = vmatpush1.msra.mxu0 %v704
  %731 = vmatprep.subr.mxu0 0.0
  %732 = vmatpush1.msra.mxu0 %v705
  %733 = vmatprep.subr.mxu0 0.0
  %734 = vmatpush1.msra.mxu0 %v706
  %735 = vmatprep.subr.mxu0 0.0
  %736 = vmatpush1.msra.mxu0 %v707
  %737 = vmatprep.subr.mxu0 0.0
  %738 = vmatpush1.msra.mxu0 0.0
  %739 = vmatprep.subr.mxu0 0.0
  %740 = vmatpush1.msra.mxu0 0.0
  %741 = vmatprep.subr.mxu0 0.0
  %742 = vmatpush1.msra.mxu0 0.0
  %743 = vmatprep.subr.mxu0 0.0
  %744 = vmatpush1.msra.mxu0 0.0
  %745 = vmatprep.subr.mxu0 0.0
  %746 = vmatpush1.msra.mxu0 0.0
  %747 = vmatprep.subr.mxu0 0.0
  %748 = vmatpush1.msra.mxu0 0.0
  %749 = vmatprep.subr.mxu0 0.0
  %750 = vmatpush1.msra.mxu0 0.0
  %751 = vmatprep.subr.mxu0 0.0
  %752 = vmatpush1.msra.mxu0 0.0
  %753 = vmatprep.subr.mxu0 0.0
  %754 = vmatpush1.msra.mxu0 0.0
  %755 = vmatprep.subr.mxu0 0.0
  %756 = vmatpush1.msra.mxu0 0.0
  %757 = vmatprep.subr.mxu0 0.0
  %758 = vmatpush1.msra.mxu0 0.0
  %759 = vmatprep.subr.mxu0 0.0
  %760 = vmatpush1.msra.mxu0 0.0
  %761 = vmatprep.subr.mxu0 0.0
  %762 = vmatpush1.msra.mxu0 0.0
  %763 = vmatprep.subr.mxu0 0.0
  %764 = vmatpush1.msra.mxu0 0.0
  %765 = vmatprep.subr.mxu0 0.0
  %766 = vmatpush1.msra.mxu0 0.0
  %767 = vmatprep.subr.mxu0 0.0
  %768 = vmatpush1.msra.mxu0 0.0
  %769 = vmatprep.subr.mxu0 0.0
  %770 = vmatpush1.msra.mxu0 0.0
  %771 = vmatprep.subr.mxu0 0.0
  %772 = vmatpush1.msra.mxu0 0.0
  %773 = vmatprep.subr.mxu0 0.0
  %774 = vmatpush1.msra.mxu0 0.0
  %775 = vmatprep.subr.mxu0 0.0
  %776 = vmatpush1.msra.mxu0 0.0
  %777 = vmatprep.subr.mxu0 0.0
  %778 = vmatpush1.msra.mxu0 0.0
  %779 = vmatprep.subr.mxu0 0.0
  %780 = vmatpush1.msra.mxu0 0.0
  %781 = vmatprep.subr.mxu0 0.0
  %782 = vmatpush1.msra.mxu0 0.0
  %783 = vmatprep.subr.mxu0 0.0
  %784 = vmatpush1.msra.mxu0 0.0
  %785 = vmatprep.subr.mxu0 0.0
  %786 = vmatpush1.msra.mxu0 0.0
  %787 = vmatprep.subr.mxu0 0.0
  %788 = vmatpush1.msra.mxu0 0.0
  %789 = vmatprep.subr.mxu0 0.0
  %790 = vmatpush1.msra.mxu0 0.0
  %791 = vmatprep.subr.mxu0 0.0
  %792 = vmatpush1.msra.mxu0 0.0
  %793 = vmatprep.mubr.f32.mxu0 0.0
  %794 = vmatmul.mubr.f32.gmra.mrb[0].mxu0 %v724
  %v795 = vpop.f32.mrb[0].mxu0
  %v796 = vadd.f32 %v715, %v795
  %v797 = vpop.f32.mrb[0].mxu0
  %798 = vmatprep.mubr.f32.mxu0 0.0
  %799 = vmatmul.mubr.f32.gmra.mrb[0].mxu0 %v727
  %v800 = vpop.f32.mrb[0].mxu0
  %v801 = vadd.f32 %v720, %v800
  %v802 = vpop.f32.mrb[0].mxu0
  %803 = vdwg.mxu0
  %v804 = vmax.f32 %v796, 0.0
  %v805 = vmax.f32 %v801, 0.0
  %v806 = vld [vmem:[%s5 + $0xf0] sm:$0xff]
  %v807 = vld [vmem:[%s5 + $0xf8] sm:$0xff]
  %v808 = vld [vmem:[%s5 + $0x100] sm:$0x1]
  %810 = vset.pattern.permute.xlu0 0
  %811 = vperm.xlu0 %810, %v806
  %v812 = vpop.permute.xlu0 %811
  %815 = vset.pattern.permute.xlu0 0
  %816 = vperm.xlu0 %815, %v807
  %v817 = vpop.permute.xlu0 %816
  %v819 = vmul.f32 %v804, %v812
  %v820 = vmul.f32 %v805, %v817
  %v821 = vadd.f32 %v819, %v820
  %v822 = vrot.slane %v821, 4
  %v823 = vadd.f32 %v821, %v822
  %v824 = vrot.slane %v823, 2
  %v825 = vadd.f32 %v823, %v824
  %v826 = vrot.slane %v825, 1
  %v827 = vadd.f32 %v825, %v826
  %829 = vset.pattern.permute.xlu0 0
  %830 = vperm.xlu0 %829, %v808
  %v831 = vpop.permute.xlu0 %830
  %v833 = vadd.f32 %v827, %v831
  %v834 = vmul.f32 %v833, 0.5
  %v835 = vtanh.pop %v834
  %v836 = vadd.f32 %v835, 1.0
  %v837 = vmul.f32 %v836, 0.5
  %838 = vst [vmem:[%s6] sm:$0x1] %v837
  // Predicated region
  $region26: #{titanic_nn_forward.1} parent=0 // pred_check
    _
  $region27: #{titanic_nn_forward.1} parent=0 // pred_check_branch
    %840 = sbr.rel (0) target = $region29
  $region28: #{titanic_nn_forward.1} parent=0 // pred_region
    _
  $region29: #{titanic_nn_forward.1} parent=0 // pred_fallthru
    _
  // Predicated region
  $region30: #{titanic_nn_forward.1} parent=0 // pred_check
    _
  $region31: #{titanic_nn_forward.1} parent=0 // pred_check_branch
    %842 = sbr.rel (0) target = $region33
  $region32: #{titanic_nn_forward.1} parent=0 // pred_region
    _
  $region33: #{titanic_nn_forward.1} parent=0 // pred_fallthru
    _

</llo_original>
